<compile_context>
chip_gen: v7x
topology: tpu7x:2x2x1
jax: 0.10.0
libtpu: 0.0.40
codegen_flags: <defaults>
</compile_context>

<pallas_src>
import jax
import jax.numpy as jnp
from jax.experimental import pallas as pl
from jax.experimental.pallas import tpu as pltpu

N_NEIGH = 30  # self.n in ItpNet


def _round_up(x, m):
    return ((x + m - 1) // m) * m


# --------------------------- fused-MLP Pallas kernel ---------------------------
def _make_mlp_kernel(n_layers):
    def kernel(*refs):
        x_ref = refs[0]
        out_ref = refs[-1]
        h = x_ref[...]                                   # bf16 (tile_m, K0)
        for j in range(n_layers):
            w = refs[1 + 2 * j][...]                     # bf16 (K_j, K_{j+1})
            b = refs[2 + 2 * j][...]                     # f32  (1,   K_{j+1})
            h = jnp.dot(h.astype(jnp.bfloat16), w,
                        preferred_element_type=jnp.float32) + b
            if j != n_layers - 1:                        # tanh on all but last Linear
                h = jnp.tanh(h)                          # keep elementwise in f32
        out_ref[...] = h.astype(out_ref.dtype)
    return kernel


def _choose_tile_m(m):
    # Small problems: ONE grid step (per-step overhead dominates; a 2-way split
    # with plain "parallel" semantics buys nothing on v5e/v6e and little on v7x).
    if m <= 512:
        return _round_up(m, 8)
    # Large problems: big tiles amortize per-grid-step overhead.
    if m >= 4096:
        return 2048
    return 512


def mlp_forward(x2d_bf16, weights_bf16, biases_f32, out_dim_true):
    """x2d_bf16: (M, K0) bf16 with K0 a multiple of 8; weights bf16; biases f32."""
    m, k0 = x2d_bf16.shape
    n_layers = len(weights_bf16)
    out_pad = weights_bf16[-1].shape[1]                  # lane-dense (multiple of 128)

    tile_m = _choose_tile_m(m)
    grid_m = -(-m // tile_m)
    m_pad = grid_m * tile_m
    if m_pad != m:
        x2d_bf16 = jnp.pad(x2d_bf16, ((0, m_pad - m), (0, 0)))

    in_specs = [pl.BlockSpec((tile_m, k0), lambda i: (i, 0))]
    flat_params = []
    for w, b in zip(weights_bf16, biases_f32):
        in_specs.append(pl.BlockSpec(tuple(w.shape), lambda i: (0, 0)))
        in_specs.append(pl.BlockSpec(tuple(b.shape), lambda i: (0, 0)))
        flat_params += [w, b]
    out_spec = pl.BlockSpec((tile_m, out_pad), lambda i: (i, 0))

    out = pl.pallas_call(
        _make_mlp_kernel(n_layers),
        out_shape=jax.ShapeDtypeStruct((m_pad, out_pad), jnp.float32),
        grid_spec=pltpu.PrefetchScalarGridSpec(
            num_scalar_prefetch=0, grid=(grid_m,),
            in_specs=in_specs, out_specs=out_spec),
        compiler_params=pltpu.CompilerParams(
            dimension_semantics=("parallel",)),
    )(x2d_bf16, *flat_params)
    return out[:m, :out_dim_true]


# -------------------- fused 4x (Conv5x5 + Tanh) Pallas kernel -------------------
def _band_weights(w_taps, W):
    """(25, cin, cout) conv weight -> banded (5, W*cin, W*cout) matmul weight.

    Wb[kh, j'*cin+ci, j*cout+co] = w[kh, kw, ci, co] with kw = j'-j+2 when
    0 <= kw < 5, else 0.  The kw shift and horizontal SAME-padding are thereby
    folded into the K dimension of a single lane-dense matmul per (layer, kh).
    """
    cin, cout = w_taps.shape[1], w_taps.shape[2]
    w5 = w_taps.reshape(5, 5, cin, cout)                     # [kh, kw, ci, co]
    jp = jnp.arange(W)[:, None]                              # j' (input col)
    jo = jnp.arange(W)[None, :]                              # j  (output col)
    kw = jp - jo + 2                                         # (W, W)
    valid = ((kw >= 0) & (kw < 5)).astype(w_taps.dtype)
    kw_c = jnp.clip(kw, 0, 4)
    wb = w5[:, kw_c]                                         # (5, j', j, ci, co)
    wb = wb * valid[None, :, :, None, None]
    wb = jnp.transpose(wb, (0, 1, 3, 2, 4))                  # (5, j', ci, j, co)
    return wb.reshape(5, W * cin, W * cout)


def _make_conv_stack_kernel(chans, H, W, TB):
    """chans = [c_in, c1, ..., c_out]; (len-1) layers of Conv5x5(pad=2)+Tanh."""
    n_layers = len(chans) - 1
    rows_per = H + 4                    # per-image rows incl. 2+2 zero halo rows
    R = TB * rows_per                   # rows per grid step ("tall" stacked images)
    M = R - 4                           # "valid" conv output rows of the tall image

    def kernel(*refs):
        x_ref = refs[0]
        w_refs = [refs[1 + 2 * l] for l in range(n_layers)]
        b_refs = [refs[2 + 2 * l] for l in range(n_layers)]
        o_ref = refs[1 + 2 * n_layers]
        s_refs = [refs[2 + 2 * n_layers], refs[3 + 2 * n_layers]]

        # Zero ONLY the 2 top + 2 bottom halo rows of each scratch (the interior,
        # incl. inter-image halo rows, is fully rewritten every layer).  Never
        # gated on program_id: with a "parallel" grid each core owns a scratch.
        for s in s_refs:
            s[0:2, :] = jnp.zeros((2, s.shape[1]), s.dtype)
            s[R - 2:R, :] = jnp.zeros((2, s.shape[1]), s.dtype)

        # Row-validity mask for the tall conv output: row m belongs to image
        # m // rows_per at local row m % rows_per; local rows >= H are garbage
        # computed across image boundaries -> force them to 0 so they become the
        # zero halo rows of the next layer's input.
        ri = jax.lax.broadcasted_iota(jnp.int32, (M, 1), 0).astype(jnp.float32)
        local = ri - float(rows_per) * jnp.floor(ri / float(rows_per))
        mask = (local < float(H)).astype(jnp.float32)            # (M, 1)

        def conv_layer(src_ref, l):
            cin = chans[l]
            kin = W * cin
            # 5 accumulating MXU matmuls, one per vertical tap kh; each LHS is a
            # contiguous lane-dense row-slice of the tall activation.
            acc = jnp.dot(src_ref[0:M, 0:kin].astype(jnp.bfloat16),
                          w_refs[l][0], preferred_element_type=jnp.float32)
            for kh in range(1, 5):
                acc = acc + jnp.dot(
                    src_ref[kh:kh + M, 0:kin].astype(jnp.bfloat16),
                    w_refs[l][kh], preferred_element_type=jnp.float32)
            return jnp.tanh(acc + b_refs[l][...])                 # (M, W*cout) f32

        src = x_ref
        for l in range(n_layers - 1):
            h = conv_layer(src, l) * mask          # zero inter-image halo rows
            dst = s_refs[l % 2]                    # ping-pong VMEM scratches
            dst[2:2 + M, 0:W * chans[l + 1]] = h   # single lane-dense store
            src = dst
        h = conv_layer(src, n_layers - 1)          # garbage rows sliced off in wrapper
        o_ref[0:M, :] = h.astype(o_ref.dtype)
        o_ref[M:R, :] = jnp.zeros((4, o_ref.shape[1]), o_ref.dtype)

    return kernel


def conv_stack_forward(data_nchw, conv_params):
    """data_nchw: (B, C0, H, W) f32; conv_params: list of ((25,cin,cout) w, (1,cout) b)."""
    B, c0, H, W = data_nchw.shape
    chans = [c0] + [w.shape[2] for w, _ in conv_params]
    c_last = chans[-1]
    rows_per = H + 4

    # Images per grid step; keep the row-block a multiple of 8 for alignment.
    TB = max(1, min(8, B))
    while (TB * rows_per) % 8 != 0:
        TB += 1
    Bp = _round_up(B, TB)
    G = Bp // TB

    # Layout plumbing outside the kernel: ONE transpose (NCHW -> rows x (W*c0))
    # plus a fused zero-pad that builds the "tall" stacked-image layout.
    x = jnp.transpose(data_nchw, (0, 2, 3, 1)).reshape(B, H, W * c0)
    if Bp != B:
        x = jnp.pad(x, ((0, Bp - B), (0, 0), (0, 0)))
    x_tall = jnp.pad(x, ((0, 0), (2, 2), (0, 0))).reshape(Bp * rows_per, W * c0)

    flat_params = []
    in_specs = [pl.BlockSpec((TB * rows_per, W * c0), lambda g: (g, 0))]
    for w_taps, bias in conv_params:
        wb = _band_weights(w_taps, W).astype(jnp.bfloat16)   # (5, W*cin, W*cout)
        bt = jnp.tile(bias, (1, W))                          # (1, W*cout) f32
        in_specs.append(pl.BlockSpec(tuple(wb.shape), lambda g: (0, 0, 0)))
        in_specs.append(pl.BlockSpec(tuple(bt.shape), lambda g: (0, 0)))
        flat_params += [wb, bt]

    c_scr = max(chans[1:-1]) if len(chans) > 2 else chans[0]
    out = pl.pallas_call(
        _make_conv_stack_kernel(chans, H, W, TB),
        out_shape=jax.ShapeDtypeStruct((Bp * rows_per, W * c_last), jnp.float32),
        grid_spec=pltpu.PrefetchScalarGridSpec(
            num_scalar_prefetch=0, grid=(G,),
            in_specs=in_specs,
            out_specs=pl.BlockSpec((TB * rows_per, W * c_last), lambda g: (g, 0)),
            scratch_shapes=[pltpu.VMEM((TB * rows_per, W * c_scr), jnp.float32),
                            pltpu.VMEM((TB * rows_per, W * c_scr), jnp.float32)]),
        compiler_params=pltpu.CompilerParams(
            dimension_semantics=("parallel",)),
    )(x_tall, *flat_params)

    out = out.reshape(Bp, rows_per, W, c_last)[:B, :H]       # drop halo/garbage rows
    return jnp.transpose(out, (0, 3, 1, 2))                   # NHWC -> NCHW


# ------------------------------ parameter setup --------------------------------
def _linear_params(key, fan_in, fan_out):
    kw, kb = jax.random.split(key)
    bound = 1.0 / float(fan_in) ** 0.5
    w = jax.random.uniform(kw, (fan_in, fan_out), jnp.float32, -bound, bound)
    b = jax.random.uniform(kb, (1, fan_out), jnp.float32, -bound, bound)
    return w, b


def _conv_params(key, c_in, c_out):
    kw, kb = jax.random.split(key)
    bound = 1.0 / float(c_in * 25) ** 0.5
    w = jax.random.uniform(kw, (25, c_in, c_out), jnp.float32, -bound, bound)
    b = jax.random.uniform(kb, (1, c_out), jnp.float32, -bound, bound)
    return w, b


def init_itpnet(key, ori_nx, ori_ny, layers1, layers2, layers3):
    n = N_NEIGH
    nodes1 = [n * 2 + 2] + list(layers1) + [n]
    nodes2 = [n * 2 + 2] + list(layers2) + [n]
    keys = jax.random.split(key, (len(nodes1) - 1) + (len(nodes2) - 1) + 4)
    ki = iter(keys)
    p1 = [_linear_params(next(ki), nodes1[j], nodes1[j + 1])
          for j in range(len(nodes1) - 1)]
    p2 = [_linear_params(next(ki), nodes2[j], nodes2[j + 1])
          for j in range(len(nodes2) - 1)]
    # 'down' conv stack (ori_ny is not None branch): 4x (Conv2d 5x5 pad=2 -> Tanh)
    pconv = [_conv_params(next(ki), layers3[j], layers3[j + 1]) for j in range(4)]
    # TODO(synk): self.layers3 (ori_nx*ori_ny MLP) and the normalize=True
    # BatchNorm1d layers are never exercised by forward(); not materialized.
    return {"layers1": p1, "layers2": p2, "down": pconv}


# ---------------------------------- forward ------------------------------------
def _prep_mlp_params(p):
    ws, bs = [], []
    n = len(p)
    for j, (w, b) in enumerate(p):
        if j == 0:
            k_pad = _round_up(w.shape[0], 8)             # fan-in 62 -> 64
            if k_pad != w.shape[0]:
                w = jnp.pad(w, ((0, k_pad - w.shape[0]), (0, 0)))
        if j == n - 1:
            n_pad = _round_up(w.shape[1], 128)           # lane-dense output: 30 -> 128
            if n_pad != w.shape[1]:
                w = jnp.pad(w, ((0, 0), (0, n_pad - w.shape[1])))
                b = jnp.pad(b, ((0, 0), (0, n_pad - b.shape[1])))
        ws.append(w.astype(jnp.bfloat16))                # MXU operands in bf16
        bs.append(b)                                     # bias stays f32
    return ws, bs


def itpnet_forward(params, neighbors=None, query_points=None, mode="1", data=None):
    if mode in ("1", "2"):
        B, Nq = neighbors.shape[0], neighbors.shape[1]
        x = jnp.concatenate([neighbors, query_points], axis=-2).reshape(B, Nq, -1)
        x2d = x.reshape(B * Nq, x.shape[-1])
        k_pad = _round_up(x2d.shape[1], 8)               # pad feature dim 62 -> 64
        if k_pad != x2d.shape[1]:
            x2d = jnp.pad(x2d, ((0, 0), (0, k_pad - x2d.shape[1])))
        x2d = x2d.astype(jnp.bfloat16)                   # halve streamed input bytes
        p = params["layers1"] if mode == "1" else params["layers2"]
        ws, bs = _prep_mlp_params(p)
        out = mlp_forward(x2d, ws, bs, out_dim_true=p[-1][0].shape[1])
        return out.reshape(B, Nq, out.shape[-1])
    elif mode == "res_cut":
        return conv_stack_forward(data, params["down"])
    return data


# ------------------------------ plain-JAX refs ----------------------------------
def _ref_mlp(x, p):
    for j, (w, b) in enumerate(p):
        x = x @ w + b
        if j != len(p) - 1:
            x = jnp.tanh(x)
    return x


def _ref_conv(data_nchw, pconv):
    x = jnp.transpose(data_nchw, (0, 2, 3, 1))
    for w, b in pconv:
        w4 = w.reshape(5, 5, w.shape[1], w.shape[2])  # HWIO
        x = jax.lax.conv_general_dilated(
            x, w4, window_strides=(1, 1), padding="SAME",
            dimension_numbers=("NHWC", "HWIO", "NHWC"))
        x = jnp.tanh(x + b.reshape(1, 1, 1, -1))
    return jnp.transpose(x, (0, 3, 1, 2))


if __name__ == "__main__":
    ori_nx, ori_ny = 16, 16
    layers1 = [64, 64]
    layers2 = [64, 64]
    layers3 = [4, 8, 8, 8, 4]

    params = init_itpnet(jax.random.PRNGKey(42), ori_nx, ori_ny,
                         layers1, layers2, layers3)

    key = jax.random.PRNGKey(0)
    k1, k2, k3 = jax.random.split(key, 3)
    B, Nq = 2, 64
    neighbors = jax.random.normal(k1, (B, Nq, N_NEIGH, 2), jnp.float32)
    query_points = jax.random.normal(k2, (B, Nq, 1, 2), jnp.float32)
    res_data = jax.random.normal(k3, (B, layers3[0], ori_nx, ori_ny), jnp.float32)

    out1 = jax.block_until_ready(
        itpnet_forward(params, neighbors, query_points, mode="1"))
    out2 = jax.block_until_ready(
        itpnet_forward(params, neighbors, query_points, mode="2"))
    out3 = jax.block_until_ready(
        itpnet_forward(params, mode="res_cut", data=res_data))

    assert out1.shape == (B, Nq, N_NEIGH)
    assert out2.shape == (B, Nq, N_NEIGH)
    assert out3.shape == (B, layers3[4], ori_nx, ori_ny)

    # sanity checks vs plain-JAX f32 references.  Kernels use bf16 MXU operands
    # with f32 accumulation, so allow ~1e-2-level drift from the f32 refs.
    x2d = jnp.concatenate([neighbors, query_points], axis=-2).reshape(B * Nq, -1)
    ref1 = _ref_mlp(x2d, params["layers1"]).reshape(B, Nq, -1)
    ref2 = _ref_mlp(x2d, params["layers2"]).reshape(B, Nq, -1)
    ref3 = _ref_conv(res_data, params["down"])
    assert float(jnp.max(jnp.abs(out1 - ref1))) < 1e-1
    assert float(jnp.max(jnp.abs(out2 - ref2))) < 1e-1
    assert float(jnp.max(jnp.abs(out3 - ref3))) < 1e-1

    print("KERNEL_OK")
</pallas_src>

<mosaic_0001>
module attributes {stable_mosaic.version = 11 : i64} {
  func.func @kernel(%arg0: i32, %arg1: memref<128x64xbf16, #tpu.memory_space<vmem>>, %arg2: memref<64x64xbf16, #tpu.memory_space<vmem>>, %arg3: memref<1x64xf32, #tpu.memory_space<vmem>>, %arg4: memref<64x64xbf16, #tpu.memory_space<vmem>>, %arg5: memref<1x64xf32, #tpu.memory_space<vmem>>, %arg6: memref<64x128xbf16, #tpu.memory_space<vmem>>, %arg7: memref<1x128xf32, #tpu.memory_space<vmem>>, %arg8: memref<128x128xf32, #tpu.memory_space<vmem>>) attributes {dimension_semantics = [#tpu.dimension_semantics<parallel>], iteration_bounds = array<i64: 1>, scalar_prefetch = 0 : i64, scratch_operands = 0 : i64, tpu.core_type = #tpu.core_type<tc>, window_params = [{transform_indices = @transform_0, window_bounds = array<i64: 128, 64>}, {pipeline_mode = #tpu.pipeline_mode<synchronous>, transform_indices = @transform_1, window_bounds = array<i64: 64, 64>}, {pipeline_mode = #tpu.pipeline_mode<synchronous>, transform_indices = @transform_2, window_bounds = array<i64: 1, 64>}, {pipeline_mode = #tpu.pipeline_mode<synchronous>, transform_indices = @transform_3, window_bounds = array<i64: 64, 64>}, {pipeline_mode = #tpu.pipeline_mode<synchronous>, transform_indices = @transform_4, window_bounds = array<i64: 1, 64>}, {pipeline_mode = #tpu.pipeline_mode<synchronous>, transform_indices = @transform_5, window_bounds = array<i64: 64, 128>}, {pipeline_mode = #tpu.pipeline_mode<synchronous>, transform_indices = @transform_6, window_bounds = array<i64: 1, 128>}, {transform_indices = @transform_7, window_bounds = array<i64: 128, 128>}]} {
    %c0 = arith.constant 0 : index
    %c0_0 = arith.constant 0 : index
    %0 = vector.load %arg1[%c0, %c0_0] : memref<128x64xbf16, #tpu.memory_space<vmem>>, vector<128x64xbf16>
    %c0_1 = arith.constant 0 : index
    %c0_2 = arith.constant 0 : index
    %1 = vector.load %arg2[%c0_1, %c0_2] : memref<64x64xbf16, #tpu.memory_space<vmem>>, vector<64x64xbf16>
    %c0_3 = arith.constant 0 : index
    %c0_4 = arith.constant 0 : index
    %2 = vector.load %arg3[%c0_3, %c0_4] : memref<1x64xf32, #tpu.memory_space<vmem>>, vector<1x64xf32>
    %cst = arith.constant dense<0.000000e+00> : vector<128x64xf32>
    %3 = tpu.matmul %0, %1, %cst {dimension_numbers = #tpu.dot_dimension_numbers<[1], [0], [0], [1], [0, 0, 1, 1], [], []>} : vector<128x64xbf16>, vector<64x64xbf16>, vector<128x64xf32> -> vector<128x64xf32>
    %4 = vector.broadcast %2 : vector<1x64xf32> to vector<128x64xf32>
    %5 = arith.addf %3, %4 : vector<128x64xf32>
    %6 = math.tanh %5 : vector<128x64xf32>
    %c0_5 = arith.constant 0 : index
    %c0_6 = arith.constant 0 : index
    %7 = vector.load %arg4[%c0_5, %c0_6] : memref<64x64xbf16, #tpu.memory_space<vmem>>, vector<64x64xbf16>
    %c0_7 = arith.constant 0 : index
    %c0_8 = arith.constant 0 : index
    %8 = vector.load %arg5[%c0_7, %c0_8] : memref<1x64xf32, #tpu.memory_space<vmem>>, vector<1x64xf32>
    %9 = arith.truncf %6 : vector<128x64xf32> to vector<128x64xbf16>
    %cst_9 = arith.constant dense<0.000000e+00> : vector<128x64xf32>
    %10 = tpu.matmul %9, %7, %cst_9 {dimension_numbers = #tpu.dot_dimension_numbers<[1], [0], [0], [1], [0, 0, 1, 1], [], []>} : vector<128x64xbf16>, vector<64x64xbf16>, vector<128x64xf32> -> vector<128x64xf32>
    %11 = vector.broadcast %8 : vector<1x64xf32> to vector<128x64xf32>
    %12 = arith.addf %10, %11 : vector<128x64xf32>
    %13 = math.tanh %12 : vector<128x64xf32>
    %c0_10 = arith.constant 0 : index
    %c0_11 = arith.constant 0 : index
    %14 = vector.load %arg6[%c0_10, %c0_11] : memref<64x128xbf16, #tpu.memory_space<vmem>>, vector<64x128xbf16>
    %c0_12 = arith.constant 0 : index
    %c0_13 = arith.constant 0 : index
    %15 = vector.load %arg7[%c0_12, %c0_13] : memref<1x128xf32, #tpu.memory_space<vmem>>, vector<1x128xf32>
    %16 = arith.truncf %13 : vector<128x64xf32> to vector<128x64xbf16>
    %cst_14 = arith.constant dense<0.000000e+00> : vector<128x128xf32>
    %17 = tpu.matmul %16, %14, %cst_14 {dimension_numbers = #tpu.dot_dimension_numbers<[1], [0], [0], [1], [0, 0, 1, 1], [], []>} : vector<128x64xbf16>, vector<64x128xbf16>, vector<128x128xf32> -> vector<128x128xf32>
    %18 = vector.broadcast %15 : vector<1x128xf32> to vector<128x128xf32>
    %19 = arith.addf %17, %18 : vector<128x128xf32>
    %c0_15 = arith.constant 0 : index
    %c0_16 = arith.constant 0 : index
    %20 = vector.load %arg8[%c0_15, %c0_16] : memref<128x128xf32, #tpu.memory_space<vmem>>, vector<128x128xf32>
    tpu.vector_store %arg8[%c0_15, %c0_16], %19 {strides = array<i32>} : memref<128x128xf32, #tpu.memory_space<vmem>>, vector<128x128xf32>,
    return
  }
  func.func @transform_0(%arg0: i32) -> (i32, i32) {
    %c0_i32 = arith.constant 0 : i32
    %c0_i32_0 = arith.constant 0 : i32
    return %arg0, %c0_i32 : i32, i32
  }
  func.func @transform_1(%arg0: i32) -> (i32, i32) {
    %c0_i32 = arith.constant 0 : i32
    %c0_i32_0 = arith.constant 0 : i32
    %c0_i32_1 = arith.constant 0 : i32
    return %c0_i32, %c0_i32_0 : i32, i32
  }
  func.func @transform_2(%arg0: i32) -> (i32, i32) {
    %c0_i32 = arith.constant 0 : i32
    %c0_i32_0 = arith.constant 0 : i32
    %c0_i32_1 = arith.constant 0 : i32
    return %c0_i32, %c0_i32_0 : i32, i32
  }
  func.func @transform_3(%arg0: i32) -> (i32, i32) {
    %c0_i32 = arith.constant 0 : i32
    %c0_i32_0 = arith.constant 0 : i32
    %c0_i32_1 = arith.constant 0 : i32
    return %c0_i32, %c0_i32_0 : i32, i32
  }
  func.func @transform_4(%arg0: i32) -> (i32, i32) {
    %c0_i32 = arith.constant 0 : i32
    %c0_i32_0 = arith.constant 0 : i32
    %c0_i32_1 = arith.constant 0 : i32
    return %c0_i32, %c0_i32_0 : i32, i32
  }
  func.func @transform_5(%arg0: i32) -> (i32, i32) {
    %c0_i32 = arith.constant 0 : i32
    %c0_i32_0 = arith.constant 0 : i32
    %c0_i32_1 = arith.constant 0 : i32
    return %c0_i32, %c0_i32_0 : i32, i32
  }
  func.func @transform_6(%arg0: i32) -> (i32, i32) {
    %c0_i32 = arith.constant 0 : i32
    %c0_i32_0 = arith.constant 0 : i32
    %c0_i32_1 = arith.constant 0 : i32
    return %c0_i32, %c0_i32_0 : i32, i32
  }
  func.func @transform_7(%arg0: i32) -> (i32, i32) {
    %c0_i32 = arith.constant 0 : i32
    %c0_i32_0 = arith.constant 0 : i32
    return %arg0, %c0_i32 : i32, i32
  }
}

</mosaic_0001>

<llo_original>
// kernel: tpu_custom_call.1
$region0: #{tpu_custom_call.1}
  #allocation0 [shape = 'u32[]', space=smem, size = 0x4, offset = 0x4, fixed_abs, tag = 'smem constant byte address 0x4 - core index']
  #allocation1 [shape = 'u32[144,128]{1,0:T(1,128)}', space=vmem, size = 0x12000, scoped, tag = 'internal scratch']
  %s0 = inlined_call_operand.vmem [shape: bf16[128,64], index: 0, kind: input, shape index: {}]
  %s1 = inlined_call_operand.vmem [shape: bf16[64,64], index: 1, kind: input, shape index: {}]
  %s2 = inlined_call_operand.vmem [shape: f32[1,64], index: 2, kind: input, shape index: {}]
  %s3 = inlined_call_operand.vmem [shape: bf16[64,64], index: 3, kind: input, shape index: {}]
  %s4 = inlined_call_operand.vmem [shape: f32[1,64], index: 4, kind: input, shape index: {}]
  %s5 = inlined_call_operand.vmem [shape: bf16[64,128], index: 5, kind: input, shape index: {}]
  %s6 = inlined_call_operand.vmem [shape: f32[1,128], index: 6, kind: input, shape index: {}]
  %s7 = inlined_call_operand.hbm [shape: f32[128,128], index: 7, kind: output, shape index: {}]
  %s8 = sld [smem:[#allocation0]]
  $region38: #{tpu_custom_call.1} parent=0
    _
  %s10 = ssub.s32 1, %s8
  %s11 = scalar_select 0, %s10, %s8
  $region1: #{tpu_custom_call.1} parent=0
    #allocation2 [shape = 'u8[65536]{0}', space=vmem, size = 0x10000, scoped, tag = 'output window, operand 0, single buffered']
    #allocation3 [shape = 's32[1]{0}', space=sflag, size = 0x4, scoped, tag = 'scoped memory for tpu_custom_call.1']
    %12 = vsyncpa [#allocation3], 0
    // Predicated region
    $region2: #{tpu_custom_call.1} parent=1 // pred_check
      _
    $region3: #{tpu_custom_call.1} parent=1 // pred_check_branch
      %14 = sbr.rel (0) target = $region5
    $region4: #{tpu_custom_call.1} parent=1 // pred_region
      _
    $region5: #{tpu_custom_call.1} parent=1 // pred_fallthru
      _
    // Predicated region
    $region6: #{tpu_custom_call.1} parent=1 // pred_check
      _
    $region7: #{tpu_custom_call.1} parent=1 // pred_check_branch
      %16 = sbr.rel (0) target = $region9
    $region8: #{tpu_custom_call.1} parent=1 // pred_region
      _
    $region9: #{tpu_custom_call.1} parent=1 // pred_fallthru
      _
    // Predicated region
    $region10: #{tpu_custom_call.1} parent=1 // pred_check
      _
    $region11: #{tpu_custom_call.1} parent=1 // pred_check_branch
      %18 = sbr.rel (0) target = $region13
    $region12: #{tpu_custom_call.1} parent=1 // pred_region
      _
    $region13: #{tpu_custom_call.1} parent=1 // pred_fallthru
      _
    // Predicated region
    $region14: #{tpu_custom_call.1} parent=1 // pred_check
      _
    $region15: #{tpu_custom_call.1} parent=1 // pred_check_branch
      %20 = sbr.rel (0) target = $region17
    $region16: #{tpu_custom_call.1} parent=1 // pred_region
      _
    $region17: #{tpu_custom_call.1} parent=1 // pred_fallthru
      _
    // Predicated region
    $region18: #{tpu_custom_call.1} parent=1 // pred_check
      _
    $region19: #{tpu_custom_call.1} parent=1 // pred_check_branch
      %22 = sbr.rel (0) target = $region21
    $region20: #{tpu_custom_call.1} parent=1 // pred_region
      _
    $region21: #{tpu_custom_call.1} parent=1 // pred_fallthru
      _
    // Predicated region
    $region22: #{tpu_custom_call.1} parent=1 // pred_check
      _
    $region23: #{tpu_custom_call.1} parent=1 // pred_check_branch
      %24 = sbr.rel (0) target = $region25
    $region24: #{tpu_custom_call.1} parent=1 // pred_region
      _
    $region25: #{tpu_custom_call.1} parent=1 // pred_fallthru
      _
    // Predicated region
    $region26: #{tpu_custom_call.1} parent=1 // pred_check
      _
    $region27: #{tpu_custom_call.1} parent=1 // pred_check_branch
      %26 = sbr.rel (0) target = $region29
    $region28: #{tpu_custom_call.1} parent=1 // pred_region
      _
    $region29: #{tpu_custom_call.1} parent=1 // pred_fallthru
      _
    %v28 = vld [vmem:[%s0] sm:$0xf]
    %v29 = vld [vmem:[%s0 + $0x4] sm:$0xf]
    %v30 = vld [vmem:[%s0 + $0x8] sm:$0xf]
    %v31 = vld [vmem:[%s0 + $0xc] sm:$0xf]
    %v32 = vld [vmem:[%s0 + $0x10] sm:$0xf]
    %v33 = vld [vmem:[%s0 + $0x14] sm:$0xf]
    %v34 = vld [vmem:[%s0 + $0x18] sm:$0xf]
    %v35 = vld [vmem:[%s0 + $0x1c] sm:$0xf]
    %v36 = vld [vmem:[%s0 + $0x20] sm:$0xf]
    %v37 = vld [vmem:[%s0 + $0x24] sm:$0xf]
    %v38 = vld [vmem:[%s0 + $0x28] sm:$0xf]
    %v39 = vld [vmem:[%s0 + $0x2c] sm:$0xf]
    %v40 = vld [vmem:[%s0 + $0x30] sm:$0xf]
    %v41 = vld [vmem:[%s0 + $0x34] sm:$0xf]
    %v42 = vld [vmem:[%s0 + $0x38] sm:$0xf]
    %v43 = vld [vmem:[%s0 + $0x3c] sm:$0xf]
    %v44 = vld [vmem:[%s1] sm:$0xf]
    %v45 = vld [vmem:[%s1 + $0x4] sm:$0xf]
    %v46 = vld [vmem:[%s1 + $0x8] sm:$0xf]
    %v47 = vld [vmem:[%s1 + $0xc] sm:$0xf]
    %v48 = vld [vmem:[%s1 + $0x10] sm:$0xf]
    %v49 = vld [vmem:[%s1 + $0x14] sm:$0xf]
    %v50 = vld [vmem:[%s1 + $0x18] sm:$0xf]
    %v51 = vld [vmem:[%s1 + $0x1c] sm:$0xf]
    %v52 = vld [vmem:[%s2] sm:$0x1]
    %v54 = vlaneseq
    %v55 = vshrl.u32 %v54, 7
    %v56 = vsub.s32 0, %v55
    %v57 = vrot.slane %v52, %v56
    %v75 = vunpack.c.l.b16 %v28
    %v76 = vunpack.c.l.b16 %v29
    %v77 = vunpack.c.l.b16 %v30
    %v78 = vunpack.c.l.b16 %v31
    %v79 = vunpack.c.l.b16 %v32
    %v80 = vunpack.c.l.b16 %v33
    %v81 = vunpack.c.l.b16 %v34
    %v82 = vunpack.c.l.b16 %v35
    %v83 = vunpack.c.l.b16 %v36
    %v84 = vunpack.c.l.b16 %v37
    %v85 = vunpack.c.l.b16 %v38
    %v86 = vunpack.c.l.b16 %v39
    %v87 = vunpack.c.l.b16 %v40
    %v88 = vunpack.c.l.b16 %v41
    %v89 = vunpack.c.l.b16 %v42
    %v90 = vunpack.c.l.b16 %v43
    %v91 = vpack.c.b16 %v76, %v75
    %v92 = vpack.c.b16 %v78, %v77
    %v93 = vpack.c.b16 %v80, %v79
    %v94 = vpack.c.b16 %v82, %v81
    %v95 = vpack.c.b16 %v84, %v83
    %v96 = vpack.c.b16 %v86, %v85
    %v97 = vpack.c.b16 %v88, %v87
    %v98 = vpack.c.b16 %v90, %v89
    %v107 = vunpack.c.l.b16 %v44
    %v108 = vunpack.c.l.b16 %v45
    %v109 = vunpack.c.l.b16 %v46
    %v110 = vunpack.c.l.b16 %v47
    %v111 = vunpack.c.l.b16 %v48
    %v112 = vunpack.c.l.b16 %v49
    %v113 = vunpack.c.l.b16 %v50
    %v114 = vunpack.c.l.b16 %v51
    %v115 = vpack.c.b16 %v108, %v107
    %v116 = vpack.c.b16 %v110, %v109
    %v117 = vpack.c.b16 %v112, %v111
    %v118 = vpack.c.b16 %v114, %v113
    %vm123 = vcmask 523264
    %v125 = vsel %vm123, %v91, 0
    %v128 = vsel %vm123, %v92, 0
    %v131 = vsel %vm123, %v93, 0
    %v134 = vsel %vm123, %v94, 0
    %v137 = vsel %vm123, %v95, 0
    %v140 = vsel %vm123, %v96, 0
    %v143 = vsel %vm123, %v97, 0
    %v146 = vsel %vm123, %v98, 0
    %148 = vmatprep.subr.bf16.mxu0 0
    %149 = vmatpush1.bf16.msra.mxu0 %v115
    %150 = vmatprep.subr.bf16.mxu0 0
    %151 = vmatpush1.bf16.msra.mxu0 %v116
    %152 = vmatprep.subr.bf16.mxu0 0
    %153 = vmatpush1.bf16.msra.mxu0 %v117
    %154 = vmatprep.subr.bf16.mxu0 0
    %155 = vmatpush1.bf16.msra.mxu0 %v118
    %156 = vmatprep.subr.bf16.mxu0 0
    %157 = vmatpush1.bf16.msra.mxu0 0
    %158 = vmatprep.subr.bf16.mxu0 0
    %159 = vmatpush1.bf16.msra.mxu0 0
    %160 = vmatprep.subr.bf16.mxu0 0
    %161 = vmatpush1.bf16.msra.mxu0 0
    %162 = vmatprep.subr.bf16.mxu0 0
    %163 = vmatpush1.bf16.msra.mxu0 0
    %164 = vmatprep.subr.bf16.mxu0 0
    %165 = vmatpush1.bf16.msra.mxu0 0
    %166 = vmatprep.subr.bf16.mxu0 0
    %167 = vmatpush1.bf16.msra.mxu0 0
    %168 = vmatprep.subr.bf16.mxu0 0
    %169 = vmatpush1.bf16.msra.mxu0 0
    %170 = vmatprep.subr.bf16.mxu0 0
    %171 = vmatpush1.bf16.msra.mxu0 0
    %172 = vmatprep.subr.bf16.mxu0 0
    %173 = vmatpush1.bf16.msra.mxu0 0
    %174 = vmatprep.subr.bf16.mxu0 0
    %175 = vmatpush1.bf16.msra.mxu0 0
    %176 = vmatprep.subr.bf16.mxu0 0
    %177 = vmatpush1.bf16.msra.mxu0 0
    %178 = vmatprep.subr.bf16.mxu0 0
    %179 = vmatpush1.bf16.msra.mxu0 0
    %180 = vmatprep.mubr.bf16.mxu0 0
    %181 = vmatmul.mubr.bf16.gmra.mrb[0].mxu0 %v125
    %v182 = vpop.f32.mrb[0].mxu0
    %v183 = vadd.f32 %v57, %v182
    %v184 = vpop.f32.mrb[0].mxu0
    %v185 = vpop.f32.mrb[0].mxu0
    %v186 = vadd.f32 %v57, %v185
    %v187 = vpop.f32.mrb[0].mxu0
    %188 = vmatprep.mubr.bf16.mxu0 0
    %189 = vmatmul.mubr.bf16.gmra.mrb[0].mxu0 %v128
    %v190 = vpop.f32.mrb[0].mxu0
    %v191 = vadd.f32 %v57, %v190
    %v192 = vpop.f32.mrb[0].mxu0
    %v193 = vpop.f32.mrb[0].mxu0
    %v194 = vadd.f32 %v57, %v193
    %v195 = vpop.f32.mrb[0].mxu0
    %196 = vmatprep.mubr.bf16.mxu0 0
    %197 = vmatmul.mubr.bf16.gmra.mrb[0].mxu0 %v131
    %v198 = vpop.f32.mrb[0].mxu0
    %v199 = vadd.f32 %v57, %v198
    %v200 = vpop.f32.mrb[0].mxu0
    %v201 = vpop.f32.mrb[0].mxu0
    %v202 = vadd.f32 %v57, %v201
    %v203 = vpop.f32.mrb[0].mxu0
    %204 = vmatprep.mubr.bf16.mxu0 0
    %205 = vmatmul.mubr.bf16.gmra.mrb[0].mxu0 %v134
    %v206 = vpop.f32.mrb[0].mxu0
    %v207 = vadd.f32 %v57, %v206
    %v208 = vpop.f32.mrb[0].mxu0
    %v209 = vpop.f32.mrb[0].mxu0
    %v210 = vadd.f32 %v57, %v209
    %v211 = vpop.f32.mrb[0].mxu0
    %212 = vmatprep.mubr.bf16.mxu0 0
    %213 = vmatmul.mubr.bf16.gmra.mrb[0].mxu0 %v137
    %v214 = vpop.f32.mrb[0].mxu0
    %v215 = vadd.f32 %v57, %v214
    %v216 = vpop.f32.mrb[0].mxu0
    %v217 = vpop.f32.mrb[0].mxu0
    %v218 = vadd.f32 %v57, %v217
    %v219 = vpop.f32.mrb[0].mxu0
    %220 = vmatprep.mubr.bf16.mxu0 0
    %221 = vmatmul.mubr.bf16.gmra.mrb[0].mxu0 %v140
    %v222 = vpop.f32.mrb[0].mxu0
    %v223 = vadd.f32 %v57, %v222
    %v224 = vpop.f32.mrb[0].mxu0
    %v225 = vpop.f32.mrb[0].mxu0
    %v226 = vadd.f32 %v57, %v225
    %v227 = vpop.f32.mrb[0].mxu0
    %228 = vmatprep.mubr.bf16.mxu0 0
    %229 = vmatmul.mubr.bf16.gmra.mrb[0].mxu0 %v143
    %v230 = vpop.f32.mrb[0].mxu0
    %v231 = vadd.f32 %v57, %v230
    %v232 = vpop.f32.mrb[0].mxu0
    %v233 = vpop.f32.mrb[0].mxu0
    %v234 = vadd.f32 %v57, %v233
    %v235 = vpop.f32.mrb[0].mxu0
    %236 = vmatprep.mubr.bf16.mxu0 0
    %237 = vmatmul.mubr.bf16.gmra.mrb[0].mxu0 %v146
    %v238 = vpop.f32.mrb[0].mxu0
    %v239 = vadd.f32 %v57, %v238
    %v240 = vpop.f32.mrb[0].mxu0
    %v241 = vpop.f32.mrb[0].mxu0
    %v242 = vadd.f32 %v57, %v241
    %v243 = vpop.f32.mrb[0].mxu0
    %244 = vdwg.mxu0
    %v245 = vtanh.pop %v183
    %v246 = vtanh.pop %v186
    %v247 = vtanh.pop %v191
    %v248 = vtanh.pop %v194
    %v249 = vtanh.pop %v199
    %v250 = vtanh.pop %v202
    %v251 = vtanh.pop %v207
    %v252 = vtanh.pop %v210
    %v253 = vtanh.pop %v215
    %v254 = vtanh.pop %v218
    %v255 = vtanh.pop %v223
    %v256 = vtanh.pop %v226
    %v257 = vtanh.pop %v231
    %v258 = vtanh.pop %v234
    %v259 = vtanh.pop %v239
    %v260 = vtanh.pop %v242
    %v261 = vld [vmem:[%s3] sm:$0xf]
    %v262 = vld [vmem:[%s3 + $0x4] sm:$0xf]
    %v263 = vld [vmem:[%s3 + $0x8] sm:$0xf]
    %v264 = vld [vmem:[%s3 + $0xc] sm:$0xf]
    %v265 = vld [vmem:[%s3 + $0x10] sm:$0xf]
    %v266 = vld [vmem:[%s3 + $0x14] sm:$0xf]
    %v267 = vld [vmem:[%s3 + $0x18] sm:$0xf]
    %v268 = vld [vmem:[%s3 + $0x1c] sm:$0xf]
    %v269 = vld [vmem:[%s4] sm:$0x1]
    %v270 = vpack.c.bf16 %v246, %v245
    %v271 = vpack.c.bf16 %v248, %v247
    %v272 = vpack.c.bf16 %v250, %v249
    %v273 = vpack.c.bf16 %v252, %v251
    %v274 = vpack.c.bf16 %v254, %v253
    %v275 = vpack.c.bf16 %v256, %v255
    %v276 = vpack.c.bf16 %v258, %v257
    %v277 = vpack.c.bf16 %v260, %v259
    %v279 = vlaneseq
    %v280 = vshrl.u32 %v279, 7
    %v281 = vsub.s32 0, %v280
    %v282 = vrot.slane %v269, %v281
    %v292 = vunpack.c.l.b16 %v261
    %v293 = vunpack.c.l.b16 %v262
    %v294 = vunpack.c.l.b16 %v263
    %v295 = vunpack.c.l.b16 %v264
    %v296 = vunpack.c.l.b16 %v265
    %v297 = vunpack.c.l.b16 %v266
    %v298 = vunpack.c.l.b16 %v267
    %v299 = vunpack.c.l.b16 %v268
    %v300 = vpack.c.b16 %v293, %v292
    %v301 = vpack.c.b16 %v295, %v294
    %v302 = vpack.c.b16 %v297, %v296
    %v303 = vpack.c.b16 %v299, %v298
    %v309 = vsel %vm123, %v270, 0
    %v312 = vsel %vm123, %v271, 0
    %v315 = vsel %vm123, %v272, 0
    %v318 = vsel %vm123, %v273, 0
    %v321 = vsel %vm123, %v274, 0
    %v324 = vsel %vm123, %v275, 0
    %v327 = vsel %vm123, %v276, 0
    %v330 = vsel %vm123, %v277, 0
    %332 = vmatprep.subr.bf16.mxu0 0
    %333 = vmatpush1.bf16.msra.mxu0 %v300
    %334 = vmatprep.subr.bf16.mxu0 0
    %335 = vmatpush1.bf16.msra.mxu0 %v301
    %336 = vmatprep.subr.bf16.mxu0 0
    %337 = vmatpush1.bf16.msra.mxu0 %v302
    %338 = vmatprep.subr.bf16.mxu0 0
    %339 = vmatpush1.bf16.msra.mxu0 %v303
    %340 = vmatprep.subr.bf16.mxu0 0
    %341 = vmatpush1.bf16.msra.mxu0 0
    %342 = vmatprep.subr.bf16.mxu0 0
    %343 = vmatpush1.bf16.msra.mxu0 0
    %344 = vmatprep.subr.bf16.mxu0 0
    %345 = vmatpush1.bf16.msra.mxu0 0
    %346 = vmatprep.subr.bf16.mxu0 0
    %347 = vmatpush1.bf16.msra.mxu0 0
    %348 = vmatprep.subr.bf16.mxu0 0
    %349 = vmatpush1.bf16.msra.mxu0 0
    %350 = vmatprep.subr.bf16.mxu0 0
    %351 = vmatpush1.bf16.msra.mxu0 0
    %352 = vmatprep.subr.bf16.mxu0 0
    %353 = vmatpush1.bf16.msra.mxu0 0
    %354 = vmatprep.subr.bf16.mxu0 0
    %355 = vmatpush1.bf16.msra.mxu0 0
    %356 = vmatprep.subr.bf16.mxu0 0
    %357 = vmatpush1.bf16.msra.mxu0 0
    %358 = vmatprep.subr.bf16.mxu0 0
    %359 = vmatpush1.bf16.msra.mxu0 0
    %360 = vmatprep.subr.bf16.mxu0 0
    %361 = vmatpush1.bf16.msra.mxu0 0
    %362 = vmatprep.subr.bf16.mxu0 0
    %363 = vmatpush1.bf16.msra.mxu0 0
    %364 = vmatprep.mubr.bf16.mxu0 0
    %365 = vmatmul.mubr.bf16.gmra.mrb[0].mxu0 %v309
    %v366 = vpop.f32.mrb[0].mxu0
    %v367 = vadd.f32 %v282, %v366
    %v368 = vpop.f32.mrb[0].mxu0
    %v369 = vpop.f32.mrb[0].mxu0
    %v370 = vadd.f32 %v282, %v369
    %v371 = vpop.f32.mrb[0].mxu0
    %372 = vmatprep.mubr.bf16.mxu0 0
    %373 = vmatmul.mubr.bf16.gmra.mrb[0].mxu0 %v312
    %v374 = vpop.f32.mrb[0].mxu0
    %v375 = vadd.f32 %v282, %v374
    %v376 = vpop.f32.mrb[0].mxu0
    %v377 = vpop.f32.mrb[0].mxu0
    %v378 = vadd.f32 %v282, %v377
    %v379 = vpop.f32.mrb[0].mxu0
    %380 = vmatprep.mubr.bf16.mxu0 0
    %381 = vmatmul.mubr.bf16.gmra.mrb[0].mxu0 %v315
    %v382 = vpop.f32.mrb[0].mxu0
    %v383 = vadd.f32 %v282, %v382
    %v384 = vpop.f32.mrb[0].mxu0
    %v385 = vpop.f32.mrb[0].mxu0
    %v386 = vadd.f32 %v282, %v385
    %v387 = vpop.f32.mrb[0].mxu0
    %388 = vmatprep.mubr.bf16.mxu0 0
    %389 = vmatmul.mubr.bf16.gmra.mrb[0].mxu0 %v318
    %v390 = vpop.f32.mrb[0].mxu0
    %v391 = vadd.f32 %v282, %v390
    %v392 = vpop.f32.mrb[0].mxu0
    %v393 = vpop.f32.mrb[0].mxu0
    %v394 = vadd.f32 %v282, %v393
    %v395 = vpop.f32.mrb[0].mxu0
    %396 = vmatprep.mubr.bf16.mxu0 0
    %397 = vmatmul.mubr.bf16.gmra.mrb[0].mxu0 %v321
    %v398 = vpop.f32.mrb[0].mxu0
    %v399 = vadd.f32 %v282, %v398
    %v400 = vpop.f32.mrb[0].mxu0
    %v401 = vpop.f32.mrb[0].mxu0
    %v402 = vadd.f32 %v282, %v401
    %v403 = vpop.f32.mrb[0].mxu0
    %404 = vmatprep.mubr.bf16.mxu0 0
    %405 = vmatmul.mubr.bf16.gmra.mrb[0].mxu0 %v324
    %v406 = vpop.f32.mrb[0].mxu0
    %v407 = vadd.f32 %v282, %v406
    %v408 = vpop.f32.mrb[0].mxu0
    %v409 = vpop.f32.mrb[0].mxu0
    %v410 = vadd.f32 %v282, %v409
    %v411 = vpop.f32.mrb[0].mxu0
    %412 = vmatprep.mubr.bf16.mxu0 0
    %413 = vmatmul.mubr.bf16.gmra.mrb[0].mxu0 %v327
    %v414 = vpop.f32.mrb[0].mxu0
    %v415 = vadd.f32 %v282, %v414
    %v416 = vpop.f32.mrb[0].mxu0
    %v417 = vpop.f32.mrb[0].mxu0
    %v418 = vadd.f32 %v282, %v417
    %v419 = vpop.f32.mrb[0].mxu0
    %420 = vmatprep.mubr.bf16.mxu0 0
    %421 = vmatmul.mubr.bf16.gmra.mrb[0].mxu0 %v330
    %v422 = vpop.f32.mrb[0].mxu0
    %v423 = vadd.f32 %v282, %v422
    %v424 = vpop.f32.mrb[0].mxu0
    %v425 = vpop.f32.mrb[0].mxu0
    %v426 = vadd.f32 %v282, %v425
    %v427 = vpop.f32.mrb[0].mxu0
    %428 = vdwg.mxu0
    %v429 = vtanh.pop %v367
    %v430 = vtanh.pop %v370
    %v431 = vtanh.pop %v375
    %v432 = vtanh.pop %v378
    %v433 = vtanh.pop %v383
    %v434 = vtanh.pop %v386
    %v435 = vtanh.pop %v391
    %v436 = vtanh.pop %v394
    %v437 = vtanh.pop %v399
    %v438 = vtanh.pop %v402
    %v439 = vtanh.pop %v407
    %v440 = vtanh.pop %v410
    %v441 = vtanh.pop %v415
    %v442 = vtanh.pop %v418
    %v443 = vtanh.pop %v423
    %v444 = vtanh.pop %v426
    %v445 = vld [vmem:[%s5] sm:$0xf]
    %v446 = vld [vmem:[%s5 + $0x4] sm:$0xf]
    %v447 = vld [vmem:[%s5 + $0x8] sm:$0xf]
    %v448 = vld [vmem:[%s5 + $0xc] sm:$0xf]
    %v449 = vld [vmem:[%s5 + $0x10] sm:$0xf]
    %v450 = vld [vmem:[%s5 + $0x14] sm:$0xf]
    %v451 = vld [vmem:[%s5 + $0x18] sm:$0xf]
    %v452 = vld [vmem:[%s5 + $0x1c] sm:$0xf]
    %v453 = vld [vmem:[%s6] sm:$0x1]
    %v454 = vpack.c.bf16 %v430, %v429
    %v455 = vpack.c.bf16 %v432, %v431
    %v456 = vpack.c.bf16 %v434, %v433
    %v457 = vpack.c.bf16 %v436, %v435
    %v458 = vpack.c.bf16 %v438, %v437
    %v459 = vpack.c.bf16 %v440, %v439
    %v460 = vpack.c.bf16 %v442, %v441
    %v461 = vpack.c.bf16 %v444, %v443
    %v463 = vlaneseq
    %v464 = vshrl.u32 %v463, 7
    %v465 = vsub.s32 0, %v464
    %v466 = vrot.slane %v453, %v465
    %v476 = vunpack.c.l.b16 %v445
    %v477 = vunpack.c.l.b16 %v446
    %v478 = vunpack.c.l.b16 %v447
    %v479 = vunpack.c.l.b16 %v448
    %v480 = vunpack.c.l.b16 %v449
    %v481 = vunpack.c.l.b16 %v450
    %v482 = vunpack.c.l.b16 %v451
    %v483 = vunpack.c.l.b16 %v452
    %v484 = vpack.c.b16 %v477, %v476
    %v485 = vpack.c.b16 %v479, %v478
    %v486 = vpack.c.b16 %v481, %v480
    %v487 = vpack.c.b16 %v483, %v482
    %v493 = vsel %vm123, %v454, 0
    %v496 = vsel %vm123, %v455, 0
    %v499 = vsel %vm123, %v456, 0
    %v502 = vsel %vm123, %v457, 0
    %v505 = vsel %vm123, %v458, 0
    %v508 = vsel %vm123, %v459, 0
    %v511 = vsel %vm123, %v460, 0
    %v514 = vsel %vm123, %v461, 0
    %516 = vmatprep.subr.bf16.mxu0 0
    %517 = vmatpush1.bf16.msra.mxu0 %v484
    %518 = vmatprep.subr.bf16.mxu0 0
    %519 = vmatpush1.bf16.msra.mxu0 %v485
    %520 = vmatprep.subr.bf16.mxu0 0
    %521 = vmatpush1.bf16.msra.mxu0 %v486
    %522 = vmatprep.subr.bf16.mxu0 0
    %523 = vmatpush1.bf16.msra.mxu0 %v487
    %524 = vmatprep.subr.bf16.mxu0 0
    %525 = vmatpush1.bf16.msra.mxu0 0
    %526 = vmatprep.subr.bf16.mxu0 0
    %527 = vmatpush1.bf16.msra.mxu0 0
    %528 = vmatprep.subr.bf16.mxu0 0
    %529 = vmatpush1.bf16.msra.mxu0 0
    %530 = vmatprep.subr.bf16.mxu0 0
    %531 = vmatpush1.bf16.msra.mxu0 0
    %532 = vmatprep.subr.bf16.mxu0 0
    %533 = vmatpush1.bf16.msra.mxu0 0
    %534 = vmatprep.subr.bf16.mxu0 0
    %535 = vmatpush1.bf16.msra.mxu0 0
    %536 = vmatprep.subr.bf16.mxu0 0
    %537 = vmatpush1.bf16.msra.mxu0 0
    %538 = vmatprep.subr.bf16.mxu0 0
    %539 = vmatpush1.bf16.msra.mxu0 0
    %540 = vmatprep.subr.bf16.mxu0 0
    %541 = vmatpush1.bf16.msra.mxu0 0
    %542 = vmatprep.subr.bf16.mxu0 0
    %543 = vmatpush1.bf16.msra.mxu0 0
    %544 = vmatprep.subr.bf16.mxu0 0
    %545 = vmatpush1.bf16.msra.mxu0 0
    %546 = vmatprep.subr.bf16.mxu0 0
    %547 = vmatpush1.bf16.msra.mxu0 0
    %548 = vmatprep.mubr.bf16.mxu0 0
    %549 = vmatmul.mubr.bf16.gmra.mrb[0].mxu0 %v493
    %v550 = vpop.f32.mrb[0].mxu0
    %v551 = vadd.f32 %v466, %v550
    %v552 = vpop.f32.mrb[0].mxu0
    %v553 = vpop.f32.mrb[0].mxu0
    %v554 = vadd.f32 %v466, %v553
    %v555 = vpop.f32.mrb[0].mxu0
    %556 = vmatprep.mubr.bf16.mxu0 0
    %557 = vmatmul.mubr.bf16.gmra.mrb[0].mxu0 %v496
    %v558 = vpop.f32.mrb[0].mxu0
    %v559 = vadd.f32 %v466, %v558
    %v560 = vpop.f32.mrb[0].mxu0
    %v561 = vpop.f32.mrb[0].mxu0
    %v562 = vadd.f32 %v466, %v561
    %v563 = vpop.f32.mrb[0].mxu0
    %564 = vmatprep.mubr.bf16.mxu0 0
    %565 = vmatmul.mubr.bf16.gmra.mrb[0].mxu0 %v499
    %v566 = vpop.f32.mrb[0].mxu0
    %v567 = vadd.f32 %v466, %v566
    %v568 = vpop.f32.mrb[0].mxu0
    %v569 = vpop.f32.mrb[0].mxu0
    %v570 = vadd.f32 %v466, %v569
    %v571 = vpop.f32.mrb[0].mxu0
    %572 = vmatprep.mubr.bf16.mxu0 0
    %573 = vmatmul.mubr.bf16.gmra.mrb[0].mxu0 %v502
    %v574 = vpop.f32.mrb[0].mxu0
    %v575 = vadd.f32 %v466, %v574
    %v576 = vpop.f32.mrb[0].mxu0
    %v577 = vpop.f32.mrb[0].mxu0
    %v578 = vadd.f32 %v466, %v577
    %v579 = vpop.f32.mrb[0].mxu0
    %580 = vmatprep.mubr.bf16.mxu0 0
    %581 = vmatmul.mubr.bf16.gmra.mrb[0].mxu0 %v505
    %v582 = vpop.f32.mrb[0].mxu0
    %v583 = vadd.f32 %v466, %v582
    %v584 = vpop.f32.mrb[0].mxu0
    %v585 = vpop.f32.mrb[0].mxu0
    %v586 = vadd.f32 %v466, %v585
    %v587 = vpop.f32.mrb[0].mxu0
    %588 = vmatprep.mubr.bf16.mxu0 0
    %589 = vmatmul.mubr.bf16.gmra.mrb[0].mxu0 %v508
    %v590 = vpop.f32.mrb[0].mxu0
    %v591 = vadd.f32 %v466, %v590
    %v592 = vpop.f32.mrb[0].mxu0
    %v593 = vpop.f32.mrb[0].mxu0
    %v594 = vadd.f32 %v466, %v593
    %v595 = vpop.f32.mrb[0].mxu0
    %596 = vmatprep.mubr.bf16.mxu0 0
    %597 = vmatmul.mubr.bf16.gmra.mrb[0].mxu0 %v511
    %v598 = vpop.f32.mrb[0].mxu0
    %v599 = vadd.f32 %v466, %v598
    %v600 = vpop.f32.mrb[0].mxu0
    %v601 = vpop.f32.mrb[0].mxu0
    %v602 = vadd.f32 %v466, %v601
    %v603 = vpop.f32.mrb[0].mxu0
    %604 = vmatprep.mubr.bf16.mxu0 0
    %605 = vmatmul.mubr.bf16.gmra.mrb[0].mxu0 %v514
    %v606 = vpop.f32.mrb[0].mxu0
    %v607 = vadd.f32 %v466, %v606
    %v608 = vpop.f32.mrb[0].mxu0
    %v609 = vpop.f32.mrb[0].mxu0
    %v610 = vadd.f32 %v466, %v609
    %v611 = vpop.f32.mrb[0].mxu0
    %612 = vdwg.mxu0
    %613 = vst [vmem:[#allocation2] sm:$0xff] %v551
    %614 = vst [vmem:[#allocation2 + $0x8] sm:$0xff] %v554
    %615 = vst [vmem:[#allocation2 + $0x10] sm:$0xff] %v559
    %616 = vst [vmem:[#allocation2 + $0x18] sm:$0xff] %v562
    %617 = vst [vmem:[#allocation2 + $0x20] sm:$0xff] %v567
    %618 = vst [vmem:[#allocation2 + $0x28] sm:$0xff] %v570
    %619 = vst [vmem:[#allocation2 + $0x30] sm:$0xff] %v575
    %620 = vst [vmem:[#allocation2 + $0x38] sm:$0xff] %v578
    %621 = vst [vmem:[#allocation2 + $0x40] sm:$0xff] %v583
    %622 = vst [vmem:[#allocation2 + $0x48] sm:$0xff] %v586
    %623 = vst [vmem:[#allocation2 + $0x50] sm:$0xff] %v591
    %624 = vst [vmem:[#allocation2 + $0x58] sm:$0xff] %v594
    %625 = vst [vmem:[#allocation2 + $0x60] sm:$0xff] %v599
    %626 = vst [vmem:[#allocation2 + $0x68] sm:$0xff] %v602
    %627 = vst [vmem:[#allocation2 + $0x70] sm:$0xff] %v607
    %628 = vst [vmem:[#allocation2 + $0x78] sm:$0xff] %v610
    // Predicated region
    $region30: #{tpu_custom_call.1} parent=1 // pred_check
      _
    $region31: #{tpu_custom_call.1} parent=1 // pred_check_branch
      %630 = sbr.rel (0) target = $region33
    $region32: #{tpu_custom_call.1} parent=1 // pred_region
      %s632 = ssub.s32 2048, 2048
      %633 = vsyncadd [#allocation3], %s632
      %s634 = sshll.u32 [#allocation2], 4
      %s635 = int_to_ptr.vmem [resolvable:$true] %s634
      %640 = dma.vmem_to_hbm [thread:$0]  %s635, 2048, %s7, [#allocation3], 128, 128, 8
    $region33: #{tpu_custom_call.1} parent=1 // pred_fallthru
      _
    // Predicated region
    $region34: #{tpu_custom_call.1} parent=1 // pred_check
      _
    $region35: #{tpu_custom_call.1} parent=1 // pred_check_branch
      %642 = sbr.rel (0) target = $region37
    $region36: #{tpu_custom_call.1} parent=1 // pred_region
      %643 = dma.done [#allocation3], 2048
    $region37: #{tpu_custom_call.1} parent=1 // pred_fallthru
      _
    %644 = vsyncpa [#allocation3], 1

</llo_original>
